<compile_context>
chip_gen: v6e
topology: v6e:2x2x1
jax: 0.10.0
libtpu: 0.0.40
codegen_flags: <defaults>
</compile_context>

<pallas_src>
import jax
import jax.numpy as jnp
from jax.experimental import pallas as pl
from jax.experimental.pallas import tpu as pltpu


def _copy_kernel(x_ref, o_ref):
    # Input block already matches the output block (lane-aligned / lane-tiled).
    o_ref[...] = x_ref[...]


def _slice_copy_kernel(x_ref, o_ref):
    # Input block is (slightly) wider than the output; drop the tail in VMEM.
    o_ref[...] = x_ref[:, : o_ref.shape[-1]]


def _round_up(a: int, b: int) -> int:
    return -(-a // b) * b


def _round_down(a: int, b: int) -> int:
    return (a // b) * b


def _vmem_sizes():
    """Generation-aware (scoped limit, live-tile budget) in bytes."""
    phys = 64 * 1024 * 1024  # conservative default = v7x physical VMEM
    try:
        phys = int(pltpu.get_tpu_info().vmem_capacity_bytes)
    except Exception:
        pass
    limit = max(32 * 1024 * 1024, min(phys * 3 // 4, 96 * 1024 * 1024))
    budget = limit * 2 // 3  # double-buffered in+out tile bytes
    return limit, budget


def chomp1d(x: jax.Array, chomp_size: int) -> jax.Array:
    """Equivalent of Chomp1d(chomp_size)(x) for x of shape (N, C, L)."""
    assert x.ndim == 3, "expected (N, C, L) input"
    n, c, l = x.shape
    if chomp_size == 0:
        # Intended semantics of padding == 0 is a no-op (PyTorch's `:-0` slice
        # is itself degenerate); make it explicit.
        return x
    assert 0 < chomp_size < l, "chomp_size must be in [0, L)"
    l_out = l - chomp_size

    rows = n * c
    x2 = x.reshape(rows, l)  # free: the chomp only touches the last axis

    itemsize = jnp.dtype(x.dtype).itemsize
    pack = max(8, 32 // itemsize)          # sublane packing: 8 / 16 / 32
    vmem_limit, vmem_budget = _vmem_sizes()
    target_steps = 8                       # ~>=4 pipelined steps per TC

    aligned = (l_out % 128 == 0)
    # Input lane extent: never read the chomped tail past the next lane
    # boundary (full L only when L_out rounds past it).
    in_block_l = l_out if aligned else min(l, _round_up(l_out, 128))

    # Live tile bytes for a minimal-row tile (in + out, double-buffered).
    min_tile_bytes = 2 * pack * (in_block_l + l_out) * itemsize

    if min_tile_bytes <= vmem_budget:
        # ---- Path A: 1-D row grid, full output lane extent per block. ----
        kernel = _copy_kernel if in_block_l == l_out else _slice_copy_kernel
        bytes_per_row = 2 * (in_block_l + l_out) * itemsize
        max_tr = _round_down(max(pack, vmem_budget // bytes_per_row), pack)
        if rows <= pack:
            tr = rows                      # full-extent row block (tiny input)
        else:
            # Biggest tile that fits VMEM, but keep >= ~target_steps grid
            # steps so the pipeline can overlap read / copy / writeback.
            tr_pipe = max(pack, _round_down(rows // target_steps, pack))
            tr = min(max_tr, tr_pipe)
        grid = (pl.cdiv(rows, tr),)
        in_specs = [pl.BlockSpec((tr, in_block_l), lambda i: (i, 0))]
        out_specs = pl.BlockSpec((tr, l_out), lambda i: (i, 0))
        semantics = ("parallel",)
    else:
        # ---- Path B: 2-D (row, lane) grid of straight block copies; only
        # triggered for extremely long sequences where a minimal-row tile
        # with the full lane extent would overflow the VMEM budget. ----
        kernel = _copy_kernel
        tr = pack
        max_tc = vmem_budget // (2 * 2 * tr * itemsize)
        tc = max(128, min(_round_up(l_out, 128), _round_down(max_tc, 128)))
        grid = (pl.cdiv(rows, tr), pl.cdiv(l_out, tc))
        in_specs = [pl.BlockSpec((tr, tc), lambda i, j: (i, j))]
        out_specs = pl.BlockSpec((tr, tc), lambda i, j: (i, j))
        semantics = ("parallel", "parallel")

    out2 = pl.pallas_call(
        kernel,
        out_shape=jax.ShapeDtypeStruct((rows, l_out), x.dtype),
        grid_spec=pltpu.PrefetchScalarGridSpec(
            num_scalar_prefetch=0,
            grid=grid,
            in_specs=in_specs,
            out_specs=out_specs,
        ),
        compiler_params=pltpu.CompilerParams(
            dimension_semantics=semantics,
            vmem_limit_bytes=vmem_limit,
        ),
    )(x2)

    return out2.reshape(n, c, l_out)


if __name__ == "__main__":
    # Chomp1d has no parameters; only chomp_size from __init__.
    chomp_size = 3
    N, C, L = 2, 4, 16

    key = jax.random.PRNGKey(0)
    x = jax.random.normal(key, (N, C, L), dtype=jnp.float32)

    out = chomp1d(x, chomp_size)
    jax.block_until_ready(out)

    # Correctness check against the pure-JAX reference (same as torch slice).
    ref = x[:, :, :-chomp_size]
    assert out.shape == (N, C, L - chomp_size)
    assert out.dtype == x.dtype
    assert jnp.array_equal(out, ref)

    # Lane-aligned shape: exercises the shrunk-input straight-copy path with a
    # multi-step pipelined grid (rows=256 -> 8 grid steps of 32 rows).
    N2, C2, L2, ch2 = 4, 64, 640, 128  # L_out = 512, rows = 256
    x_big = jax.random.normal(jax.random.PRNGKey(1), (N2, C2, L2), jnp.float32)
    out_big = chomp1d(x_big, ch2)
    jax.block_until_ready(out_big)
    assert jnp.array_equal(out_big, x_big[:, :, :-ch2])

    # bf16 input: exercises the dtype-aware sublane packing (tr multiple of 16)
    # on the non-aligned slice path.
    N3, C3, L3, ch3 = 2, 16, 40, 5  # L_out = 35, rows = 32
    x_bf = jax.random.normal(jax.random.PRNGKey(2), (N3, C3, L3), jnp.bfloat16)
    out_bf = chomp1d(x_bf, ch3)
    jax.block_until_ready(out_bf)
    assert out_bf.dtype == jnp.bfloat16
    assert jnp.array_equal(out_bf, x_bf[:, :, :-ch3])

    print("KERNEL_OK")
</pallas_src>

<mosaic_0001>
module attributes {stable_mosaic.version = 11 : i64} {
  func.func @_slice_copy_kernel(%arg0: i32, %arg1: memref<8x16xf32, #tpu.memory_space<vmem>>, %arg2: memref<8x13xf32, #tpu.memory_space<vmem>>) attributes {dimension_semantics = [#tpu.dimension_semantics<parallel>], iteration_bounds = array<i64: 1>, scalar_prefetch = 0 : i64, scratch_operands = 0 : i64, tpu.core_type = #tpu.core_type<tc>, window_params = [{transform_indices = @transform_0, window_bounds = array<i64: 8, 16>}, {transform_indices = @transform_1, window_bounds = array<i64: 8, 13>}]} {
    %c0 = arith.constant 0 : index
    %c0_0 = arith.constant 0 : index
    %0 = vector.load %arg1[%c0, %c0_0] : memref<8x16xf32, #tpu.memory_space<vmem>>, vector<8x13xf32>
    %c0_1 = arith.constant 0 : index
    %c0_2 = arith.constant 0 : index
    %1 = vector.load %arg2[%c0_1, %c0_2] : memref<8x13xf32, #tpu.memory_space<vmem>>, vector<8x13xf32>
    tpu.vector_store %arg2[%c0_1, %c0_2], %0 {strides = array<i32>} : memref<8x13xf32, #tpu.memory_space<vmem>>, vector<8x13xf32>,
    return
  }
  func.func @transform_0(%arg0: i32) -> (i32, i32) {
    %c0_i32 = arith.constant 0 : i32
    %c0_i32_0 = arith.constant 0 : i32
    return %arg0, %c0_i32 : i32, i32
  }
  func.func @transform_1(%arg0: i32) -> (i32, i32) {
    %c0_i32 = arith.constant 0 : i32
    %c0_i32_0 = arith.constant 0 : i32
    return %arg0, %c0_i32 : i32, i32
  }
}

</mosaic_0001>

<llo_original>
// kernel: tpu_custom_call.1
$region0: #{tpu_custom_call.1}
  #allocation0 [shape = 'u32[]', space=smem, size = 0x4, offset = 0x4, fixed_abs, tag = 'smem constant byte address 0x4 - core index']
  #allocation1 [shape = 'u32[144,128]{1,0:T(1,128)}', space=vmem, size = 0x12000, scoped, tag = 'internal scratch']
  %s0 = inlined_call_operand.hbm [shape: f32[8,16], index: 0, kind: input, shape index: {}]
  %s1 = inlined_call_operand.hbm [shape: f32[8,13], index: 1, kind: output, shape index: {}]
  %s2 = sld [smem:[#allocation0]]
  $region18: #{tpu_custom_call.1} parent=0
    _
  %s4 = ssub.s32 1, %s2
  %s5 = scalar_select 0, %s4, %s2
  $region1: #{tpu_custom_call.1} parent=0
    #allocation2 [shape = 'u8[4096]{0}', space=vmem, size = 0x1000, scoped, tag = 'input window, operand 0, single buffered']
    #allocation3 [shape = 's32[1]{0}', space=sflag, size = 0x4, scoped, tag = 'scoped memory for tpu_custom_call.1']
    #allocation4 [shape = 's32[1]{0}', space=sflag, size = 0x4, scoped, tag = 'scoped memory for tpu_custom_call.1']
    #allocation5 [shape = 'u8[4096]{0}', space=vmem, size = 0x1000, scoped, tag = 'output window, operand 0, single buffered']
    %6 = vsyncpa [#allocation3], 0
    %7 = vsyncpa [#allocation4], 0
    // Predicated region
    $region2: #{tpu_custom_call.1} parent=1 // pred_check
      _
    $region3: #{tpu_custom_call.1} parent=1 // pred_check_branch
      %9 = sbr.rel (0) target = $region5
    $region4: #{tpu_custom_call.1} parent=1 // pred_region
      %s11 = ssub.s32 128, 128
      %12 = vsyncadd [#allocation3], %s11
      %s14 = sshll.u32 [#allocation2], 4
      %s15 = int_to_ptr.vmem [resolvable:$true] %s14
      %17 = dma.hbm_to_vmem [thread:$0]  %s0, 128, %s15, [#allocation3]
    $region5: #{tpu_custom_call.1} parent=1 // pred_fallthru
      _
    // Predicated region
    $region6: #{tpu_custom_call.1} parent=1 // pred_check
      _
    $region7: #{tpu_custom_call.1} parent=1 // pred_check_branch
      %19 = sbr.rel (0) target = $region9
    $region8: #{tpu_custom_call.1} parent=1 // pred_region
      %20 = dma.done [#allocation3], 128
    $region9: #{tpu_custom_call.1} parent=1 // pred_fallthru
      _
    %v21 = vld [vmem:[#allocation2] sm:$0xff]
    %vm22 = vcmask 105472
    %23 = vst.msk [vmem:[#allocation5] sm:$0xff] %vm22, %v21
    // Predicated region
    $region10: #{tpu_custom_call.1} parent=1 // pred_check
      _
    $region11: #{tpu_custom_call.1} parent=1 // pred_check_branch
      %25 = sbr.rel (0) target = $region13
    $region12: #{tpu_custom_call.1} parent=1 // pred_region
      %s27 = ssub.s32 128, 128
      %28 = vsyncadd [#allocation4], %s27
      %s30 = sshll.u32 [#allocation5], 4
      %s31 = int_to_ptr.vmem [resolvable:$true] %s30
      %33 = dma.vmem_to_hbm [thread:$0]  %s31, 128, %s1, [#allocation4]
    $region13: #{tpu_custom_call.1} parent=1 // pred_fallthru
      _
    // Predicated region
    $region14: #{tpu_custom_call.1} parent=1 // pred_check
      _
    $region15: #{tpu_custom_call.1} parent=1 // pred_check_branch
      %35 = sbr.rel (0) target = $region17
    $region16: #{tpu_custom_call.1} parent=1 // pred_region
      %36 = dma.done [#allocation4], 128
    $region17: #{tpu_custom_call.1} parent=1 // pred_fallthru
      _
    %37 = vsyncpa [#allocation3], 1
    %38 = vsyncpa [#allocation4], 1

</llo_original>
